<compile_context>
chip_gen: v7x
topology: tpu7x:2x2x1
jax: 0.10.0
libtpu: 0.0.40
codegen_flags: <defaults>
</compile_context>

<pallas_src>
import functools
import math

import jax
import jax.numpy as jnp
from jax.experimental import pallas as pl
from jax.experimental.pallas import tpu as pltpu


# ----------------------------------------------------------------------------- kernel


def lstm_cell_kernel(x_ref, h_ref, wx_ref, wh_ref, scale_ref, b_ref, c_ref,
                     h_out_ref, c_out_ref, *, apply_scale, compute_dtype):
    """One hidden-block of the LSTM cell.

    x_ref:     (B, input_size)   input activations (original dtype)
    h_ref:     (B, hidden)       previous hidden state (original dtype)
    wx_ref:    (input_size, 4*tn) packed [i|f|g|o] input->hidden weights for this block
    wh_ref:    (hidden, 4*tn)     packed [i|f|g|o] hidden->hidden weights for this block
    scale_ref: (1, 4*tn) f32      per-column dequant scale (ones if not quantized)
    b_ref:     (1, 4*tn) f32      fused bias (b_ih + b_hh)
    c_ref:     (B, tn)            previous cell state slice
    """
    tn = c_ref.shape[1]
    cd = compute_dtype

    x = x_ref[...].astype(cd)
    h = h_ref[...].astype(cd)
    wx = wx_ref[...].astype(cd)      # no-op if stored in cd; int8 -> cd dequant cast
    wh = wh_ref[...].astype(cd)

    # Two MXU matmuls accumulated in f32 (extra MXU push is free: kernel is DMA-bound).
    gates = jnp.dot(x, wx, preferred_element_type=jnp.float32)
    gates = gates + jnp.dot(h, wh, preferred_element_type=jnp.float32)
    if apply_scale:
        gates = gates * scale_ref[...]         # per-column int8 dequant scale
    gates = gates + b_ref[...]

    # Lane-aligned gate slices (tn is a multiple of 128 or the full width).
    i_gate = jax.nn.sigmoid(gates[:, 0 * tn:1 * tn])
    f_gate = jax.nn.sigmoid(gates[:, 1 * tn:2 * tn])
    g_gate = jnp.tanh(gates[:, 2 * tn:3 * tn])
    o_gate = jax.nn.sigmoid(gates[:, 3 * tn:4 * tn])

    c_prev = c_ref[...].astype(jnp.float32)
    c_new = f_gate * c_prev + i_gate * g_gate
    h_new = o_gate * jnp.tanh(c_new)

    c_out_ref[...] = c_new.astype(c_out_ref.dtype)
    h_out_ref[...] = h_new.astype(h_out_ref.dtype)


# ----------------------------------------------------------------------------- sizing


def _scoped_vmem_bytes():
    """Generation-aware scoped-VMEM limit for this kernel."""
    physical = None
    try:
        info = pltpu.get_tpu_info()
        physical = getattr(info, "vmem_capacity_bytes", None)
    except Exception:
        physical = None
    if not physical:
        physical = 64 * 1024 * 1024       # conservative fallback: v7x per-core VMEM
    # Keep half of physical for XLA / neighbouring fusions; never ask for more than 64 MiB.
    return int(min(physical // 2, 64 * 1024 * 1024))


def _pick_tile_n(hidden, k_total, batch, weight_itemsize, scoped_vmem_bytes):
    """Largest multiple-of-128 divisor of `hidden` that:
       * keeps double-buffered weight blocks within ~half the scoped VMEM budget,
       * keeps the f32 gates tensor (B x 4*tn) inside the 64-vreg file (B*tn cap),
       * prefers >= 2 blocks so the 'parallel' grid axis can shard across v7x's 2 TCs.
    """
    if hidden % 128 != 0:
        return hidden  # small / odd hidden: single full-width block
    vreg_cap = max(128, (8192 // max(batch, 1)) // 128 * 128)
    weight_budget = scoped_vmem_bytes // 2     # room left for x/h/c/outputs + headroom
    candidates = [t for t in range(128, hidden + 1, 128) if hidden % t == 0]

    def fits(t):
        dbuf_weight = 2 * k_total * 4 * t * weight_itemsize   # double-buffered blocks
        return dbuf_weight <= weight_budget and t <= vreg_cap

    feasible = [t for t in candidates if fits(t)]
    if not feasible:
        return 128
    multi = [t for t in feasible if hidden // t >= 2]
    pool = multi if multi else feasible
    return max(pool)


# ----------------------------------------------------------------------------- packing


def pack_lstm_params(weight_ih, weight_hh, bias_ih, bias_hh, *, hidden, tn,
                     weight_dtype=jnp.bfloat16):
    """Pack PyTorch-layout LSTMCell params once, outside the per-step hot path.

    weight_ih: (4H, input)   weight_hh: (4H, hidden)   bias_*: (4H,) or None
    Returns (wx, wh, scale, bias, apply_scale):
      wx: (input, 4H), wh: (hidden, 4H)  in weight_dtype (bf16/f32 or int8-quantized),
      columns permuted so each 4*tn block holds [i|f|g|o] for one hidden slice.
      scale: (1, 4H) f32 per-column dequant scale (ones unless int8).
      bias:  (1, 4H) f32, same permutation, b_ih + b_hh fused.
    """
    four_h = 4 * hidden
    wx = weight_ih.T.astype(jnp.float32)      # (input, 4H)
    wh = weight_hh.T.astype(jnp.float32)      # (hidden, 4H)
    if bias_ih is not None:
        b = (bias_ih + bias_hh).reshape(1, four_h).astype(jnp.float32)
    else:
        b = jnp.zeros((1, four_h), jnp.float32)

    nb = hidden // tn

    def permute_cols(a):
        if nb <= 1:
            return a
        r = a.shape[0]
        # (R, 4, nb, tn) -> (R, nb, 4, tn): block j along 4H holds all 4 gates for
        # hidden slice [j*tn : (j+1)*tn].
        return a.reshape(r, 4, nb, tn).transpose(0, 2, 1, 3).reshape(r, four_h)

    wx, wh, b = permute_cols(wx), permute_cols(wh), permute_cols(b)

    if jnp.dtype(weight_dtype) == jnp.dtype(jnp.int8):
        w_full = jnp.concatenate([wx, wh], axis=0)                       # pack-time only
        amax = jnp.max(jnp.abs(w_full), axis=0, keepdims=True)          # (1, 4H)
        scale = jnp.maximum(amax, 1e-12) / 127.0

        def quant(w):
            return jnp.clip(jnp.round(w / scale), -127, 127).astype(jnp.int8)

        return quant(wx), quant(wh), scale.astype(jnp.float32), b, True

    scale = jnp.ones((1, four_h), jnp.float32)
    return wx.astype(weight_dtype), wh.astype(weight_dtype), scale, b, False


# ----------------------------------------------------------------------------- wrapper


def lstm_cell_packed(x, h, c, wx, wh, scale, b, *, tn,
                     compute_dtype=jnp.bfloat16, apply_scale=False,
                     alias_state=False, vmem_limit_bytes=None):
    """Hot-path LSTM cell step with pre-packed parameters."""
    batch, input_size = x.shape
    hidden = h.shape[1]
    assert hidden % tn == 0
    nb = hidden // tn
    four_h = 4 * hidden
    k_total = input_size + hidden

    if vmem_limit_bytes is None:
        vmem_limit_bytes = _scoped_vmem_bytes()

    weight_itemsize = jnp.dtype(wx.dtype).itemsize
    weight_bytes = k_total * four_h * weight_itemsize
    act_bytes = (x.size * x.dtype.itemsize + h.size * h.dtype.itemsize
                 + c.size * c.dtype.itemsize + 2 * batch * hidden * 4
                 + 2 * four_h * 4)
    cost = pl.CostEstimate(
        flops=2 * batch * k_total * four_h,
        transcendentals=5 * batch * hidden,           # 3 sigmoid + 2 tanh per element
        bytes_accessed=int(weight_bytes + act_bytes),
    )

    kernel = functools.partial(lstm_cell_kernel,
                               apply_scale=apply_scale,
                               compute_dtype=compute_dtype)

    # Inputs: (x, h, wx, wh, scale, b, c); outputs: (h_out, c_out).
    aliases = {}
    if alias_state:
        aliases = {1: 0, 6: 1}   # h -> h_out, c -> c_out (shape & dtype always match)

    h_out, c_out = pl.pallas_call(
        kernel,
        out_shape=(
            jax.ShapeDtypeStruct((batch, hidden), h.dtype),
            jax.ShapeDtypeStruct((batch, hidden), c.dtype),
        ),
        grid_spec=pltpu.PrefetchScalarGridSpec(
            num_scalar_prefetch=0,
            grid=(nb,),
            in_specs=[
                # Activations: same block every step -> DMA'd into VMEM once.
                pl.BlockSpec((batch, input_size), lambda j: (0, 0)),
                pl.BlockSpec((batch, hidden), lambda j: (0, 0)),
                # Weights / scale / bias: streamed per hidden block (double-buffered).
                pl.BlockSpec((input_size, 4 * tn), lambda j: (0, j)),
                pl.BlockSpec((hidden, 4 * tn), lambda j: (0, j)),
                pl.BlockSpec((1, 4 * tn), lambda j: (0, j)),
                pl.BlockSpec((1, 4 * tn), lambda j: (0, j)),
                # Previous cell state slice.
                pl.BlockSpec((batch, tn), lambda j: (0, j)),
            ],
            out_specs=[
                pl.BlockSpec((batch, tn), lambda j: (0, j)),
                pl.BlockSpec((batch, tn), lambda j: (0, j)),
            ],
        ),
        compiler_params=pltpu.CompilerParams(
            # Hidden blocks are independent -> shardable across v7x's 2 TensorCores.
            dimension_semantics=("parallel",),
            vmem_limit_bytes=vmem_limit_bytes,
        ),
        cost_estimate=cost,
        input_output_aliases=aliases,
    )(x, h, wx, wh, scale, b, c)
    return h_out, c_out


def lstm_cell(x, h, c, weight_ih, weight_hh, bias_ih=None, bias_hh=None, *,
              compute_dtype=jnp.bfloat16, weight_dtype=None, alias_state=False):
    """Convenience wrapper matching the PyTorch LSTMCell parameter layout."""
    if weight_dtype is None:
        weight_dtype = compute_dtype
    hidden = h.shape[1]
    batch, input_size = x.shape
    k_total = input_size + hidden

    scoped = _scoped_vmem_bytes()
    tn = _pick_tile_n(hidden, k_total, batch,
                      jnp.dtype(weight_dtype).itemsize, scoped)
    wx, wh, scale, b, apply_scale = pack_lstm_params(
        weight_ih, weight_hh, bias_ih, bias_hh,
        hidden=hidden, tn=tn, weight_dtype=weight_dtype)
    return lstm_cell_packed(x, h, c, wx, wh, scale, b, tn=tn,
                            compute_dtype=compute_dtype, apply_scale=apply_scale,
                            alias_state=alias_state, vmem_limit_bytes=scoped)


# ----------------------------------------------------------------------------- reference


def lstm_cell_ref(x, h, c, weight_ih, weight_hh, bias_ih, bias_hh):
    """Pure-JAX reference with PyTorch LSTMCell semantics."""
    gates = x @ weight_ih.T + bias_ih + h @ weight_hh.T + bias_hh
    hidden = h.shape[1]
    i = jax.nn.sigmoid(gates[:, 0 * hidden:1 * hidden])
    f = jax.nn.sigmoid(gates[:, 1 * hidden:2 * hidden])
    g = jnp.tanh(gates[:, 2 * hidden:3 * hidden])
    o = jax.nn.sigmoid(gates[:, 3 * hidden:4 * hidden])
    c_new = f * c + i * g
    h_new = o * jnp.tanh(c_new)
    return h_new, c_new


# ----------------------------------------------------------------------------- demo


if __name__ == "__main__":
    # Lane/sublane-aligned small shapes: batch=8 sublanes, hidden=128 lanes -> unmasked stores.
    batch = 8
    input_size = 32
    hidden_size = 128

    key = jax.random.PRNGKey(0)
    kx, kh, kc, kw1, kw2, kb1, kb2 = jax.random.split(key, 7)

    x = jax.random.normal(kx, (batch, input_size), dtype=jnp.float32)
    h0 = jax.random.normal(kh, (batch, hidden_size), dtype=jnp.float32)
    c0 = jax.random.normal(kc, (batch, hidden_size), dtype=jnp.float32)

    # Deterministic parameter init mimicking reset_parameters(): U(-stdv, stdv)
    stdv = 1.0 / math.sqrt(hidden_size)
    weight_ih = jax.random.uniform(kw1, (4 * hidden_size, input_size),
                                   minval=-stdv, maxval=stdv, dtype=jnp.float32)
    weight_hh = jax.random.uniform(kw2, (4 * hidden_size, hidden_size),
                                   minval=-stdv, maxval=stdv, dtype=jnp.float32)
    bias_ih = jax.random.uniform(kb1, (4 * hidden_size,),
                                 minval=-stdv, maxval=stdv, dtype=jnp.float32)
    bias_hh = jax.random.uniform(kb2, (4 * hidden_size,),
                                 minval=-stdv, maxval=stdv, dtype=jnp.float32)

    h1_ref, c1_ref = lstm_cell_ref(x, h0, c0, weight_ih, weight_hh, bias_ih, bias_hh)

    # 1) f32 compute path — tight numerical check against the reference.
    h1_f32, c1_f32 = lstm_cell(x, h0, c0, weight_ih, weight_hh, bias_ih, bias_hh,
                               compute_dtype=jnp.float32)
    jax.block_until_ready((h1_f32, c1_f32))
    assert jnp.allclose(h1_f32, h1_ref, atol=1e-5, rtol=1e-5), "f32 h mismatch"
    assert jnp.allclose(c1_f32, c1_ref, atol=1e-5, rtol=1e-5), "f32 c mismatch"

    # 2) bf16 weights + bf16 matmul (f32 accumulation, f32 gate/state math).
    h1_bf16, c1_bf16 = lstm_cell(x, h0, c0, weight_ih, weight_hh, bias_ih, bias_hh,
                                 compute_dtype=jnp.bfloat16)
    jax.block_until_ready((h1_bf16, c1_bf16))
    assert jnp.allclose(h1_bf16, h1_ref, atol=2e-2, rtol=2e-2), "bf16 h mismatch"
    assert jnp.allclose(c1_bf16, c1_ref, atol=2e-2, rtol=2e-2), "bf16 c mismatch"

    # 3) int8 weight stream (per-column dequant fused after the f32 accumulation),
    #    with recurrent-state aliasing enabled as it would be inside a time loop.
    h1_i8, c1_i8 = lstm_cell(x, h0, c0, weight_ih, weight_hh, bias_ih, bias_hh,
                             compute_dtype=jnp.bfloat16, weight_dtype=jnp.int8,
                             alias_state=True)
    jax.block_until_ready((h1_i8, c1_i8))
    assert jnp.allclose(h1_i8, h1_ref, atol=5e-2, rtol=5e-2), "int8 h mismatch"
    assert jnp.allclose(c1_i8, c1_ref, atol=5e-2, rtol=5e-2), "int8 c mismatch"

    print("KERNEL_OK")
</pallas_src>

<mosaic_0001>
module attributes {stable_mosaic.version = 11 : i64} {
  func.func @lstm_cell_kernel(%arg0: i32, %arg1: memref<8x32xf32, #tpu.memory_space<vmem>>, %arg2: memref<8x128xf32, #tpu.memory_space<vmem>>, %arg3: memref<32x512xf32, #tpu.memory_space<vmem>>, %arg4: memref<128x512xf32, #tpu.memory_space<vmem>>, %arg5: memref<1x512xf32, #tpu.memory_space<vmem>>, %arg6: memref<1x512xf32, #tpu.memory_space<vmem>>, %arg7: memref<8x128xf32, #tpu.memory_space<vmem>>, %arg8: memref<8x128xf32, #tpu.memory_space<vmem>>, %arg9: memref<8x128xf32, #tpu.memory_space<vmem>>) attributes {dimension_semantics = [#tpu.dimension_semantics<parallel>], iteration_bounds = array<i64: 1>, scalar_prefetch = 0 : i64, scratch_operands = 0 : i64, tpu.core_type = #tpu.core_type<tc>, window_params = [{pipeline_mode = #tpu.pipeline_mode<synchronous>, transform_indices = @transform_0, window_bounds = array<i64: 8, 32>}, {pipeline_mode = #tpu.pipeline_mode<synchronous>, transform_indices = @transform_1, window_bounds = array<i64: 8, 128>}, {transform_indices = @transform_2, window_bounds = array<i64: 32, 512>}, {transform_indices = @transform_3, window_bounds = array<i64: 128, 512>}, {transform_indices = @transform_4, window_bounds = array<i64: 1, 512>}, {transform_indices = @transform_5, window_bounds = array<i64: 1, 512>}, {transform_indices = @transform_6, window_bounds = array<i64: 8, 128>}, {transform_indices = @transform_7, window_bounds = array<i64: 8, 128>}, {transform_indices = @transform_8, window_bounds = array<i64: 8, 128>}]} {
    %c0 = arith.constant 0 : index
    %c0_0 = arith.constant 0 : index
    %0 = vector.load %arg1[%c0, %c0_0] : memref<8x32xf32, #tpu.memory_space<vmem>>, vector<8x32xf32>
    %c0_1 = arith.constant 0 : index
    %c0_2 = arith.constant 0 : index
    %1 = vector.load %arg2[%c0_1, %c0_2] : memref<8x128xf32, #tpu.memory_space<vmem>>, vector<8x128xf32>
    %c0_3 = arith.constant 0 : index
    %c0_4 = arith.constant 0 : index
    %2 = vector.load %arg3[%c0_3, %c0_4] : memref<32x512xf32, #tpu.memory_space<vmem>>, vector<32x512xf32>
    %c0_5 = arith.constant 0 : index
    %c0_6 = arith.constant 0 : index
    %3 = vector.load %arg4[%c0_5, %c0_6] : memref<128x512xf32, #tpu.memory_space<vmem>>, vector<128x512xf32>
    %cst = arith.constant dense<0.000000e+00> : vector<8x512xf32>
    %4 = tpu.matmul %0, %2, %cst {dimension_numbers = #tpu.dot_dimension_numbers<[1], [0], [0], [1], [0, 0, 1, 1], [], []>} : vector<8x32xf32>, vector<32x512xf32>, vector<8x512xf32> -> vector<8x512xf32>
    %cst_7 = arith.constant dense<0.000000e+00> : vector<8x512xf32>
    %5 = tpu.matmul %1, %3, %cst_7 {dimension_numbers = #tpu.dot_dimension_numbers<[1], [0], [0], [1], [0, 0, 1, 1], [], []>} : vector<8x128xf32>, vector<128x512xf32>, vector<8x512xf32> -> vector<8x512xf32>
    %6 = arith.addf %4, %5 : vector<8x512xf32>
    %c0_8 = arith.constant 0 : index
    %c0_9 = arith.constant 0 : index
    %7 = vector.load %arg6[%c0_8, %c0_9] : memref<1x512xf32, #tpu.memory_space<vmem>>, vector<1x512xf32>
    %8 = vector.broadcast %7 : vector<1x512xf32> to vector<8x512xf32>
    %9 = arith.addf %6, %8 : vector<8x512xf32>
    %10 = vector.extract_strided_slice %9 {offsets = [0, 0], sizes = [8, 128], strides = [1, 1]} : vector<8x512xf32> to vector<8x128xf32>
    %11 = arith.negf %10 : vector<8x128xf32>
    %12 = math.exp %11 : vector<8x128xf32>
    %cst_10 = arith.constant 1.000000e+00 : f32
    %13 = vector.broadcast %cst_10 : f32 to vector<8x128xf32>
    %14 = arith.addf %13, %12 : vector<8x128xf32>
    %15 = arith.divf %13, %14 : vector<8x128xf32>
    %16 = vector.extract_strided_slice %9 {offsets = [0, 128], sizes = [8, 128], strides = [1, 1]} : vector<8x512xf32> to vector<8x128xf32>
    %17 = arith.negf %16 : vector<8x128xf32>
    %18 = math.exp %17 : vector<8x128xf32>
    %cst_11 = arith.constant 1.000000e+00 : f32
    %19 = vector.broadcast %cst_11 : f32 to vector<8x128xf32>
    %20 = arith.addf %19, %18 : vector<8x128xf32>
    %21 = arith.divf %19, %20 : vector<8x128xf32>
    %22 = vector.extract_strided_slice %9 {offsets = [0, 256], sizes = [8, 128], strides = [1, 1]} : vector<8x512xf32> to vector<8x128xf32>
    %23 = math.tanh %22 : vector<8x128xf32>
    %24 = vector.extract_strided_slice %9 {offsets = [0, 384], sizes = [8, 128], strides = [1, 1]} : vector<8x512xf32> to vector<8x128xf32>
    %25 = arith.negf %24 : vector<8x128xf32>
    %26 = math.exp %25 : vector<8x128xf32>
    %cst_12 = arith.constant 1.000000e+00 : f32
    %27 = vector.broadcast %cst_12 : f32 to vector<8x128xf32>
    %28 = arith.addf %27, %26 : vector<8x128xf32>
    %29 = arith.divf %27, %28 : vector<8x128xf32>
    %c0_13 = arith.constant 0 : index
    %c0_14 = arith.constant 0 : index
    %30 = vector.load %arg7[%c0_13, %c0_14] : memref<8x128xf32, #tpu.memory_space<vmem>>, vector<8x128xf32>
    %31 = arith.mulf %21, %30 : vector<8x128xf32>
    %32 = arith.mulf %15, %23 : vector<8x128xf32>
    %33 = arith.addf %31, %32 : vector<8x128xf32>
    %34 = math.tanh %33 : vector<8x128xf32>
    %35 = arith.mulf %29, %34 : vector<8x128xf32>
    %c0_15 = arith.constant 0 : index
    %c0_16 = arith.constant 0 : index
    %36 = vector.load %arg9[%c0_15, %c0_16] : memref<8x128xf32, #tpu.memory_space<vmem>>, vector<8x128xf32>
    tpu.vector_store %arg9[%c0_15, %c0_16], %33 {strides = array<i32>} : memref<8x128xf32, #tpu.memory_space<vmem>>, vector<8x128xf32>,
    %c0_17 = arith.constant 0 : index
    %c0_18 = arith.constant 0 : index
    %37 = vector.load %arg8[%c0_17, %c0_18] : memref<8x128xf32, #tpu.memory_space<vmem>>, vector<8x128xf32>
    tpu.vector_store %arg8[%c0_17, %c0_18], %35 {strides = array<i32>} : memref<8x128xf32, #tpu.memory_space<vmem>>, vector<8x128xf32>,
    return
  }
  func.func @transform_0(%arg0: i32) -> (i32, i32) {
    %c0_i32 = arith.constant 0 : i32
    %c0_i32_0 = arith.constant 0 : i32
    %c0_i32_1 = arith.constant 0 : i32
    return %c0_i32, %c0_i32_0 : i32, i32
  }
  func.func @transform_1(%arg0: i32) -> (i32, i32) {
    %c0_i32 = arith.constant 0 : i32
    %c0_i32_0 = arith.constant 0 : i32
    %c0_i32_1 = arith.constant 0 : i32
    return %c0_i32, %c0_i32_0 : i32, i32
  }
  func.func @transform_2(%arg0: i32) -> (i32, i32) {
    %c0_i32 = arith.constant 0 : i32
    %c0_i32_0 = arith.constant 0 : i32
    return %c0_i32, %arg0 : i32, i32
  }
  func.func @transform_3(%arg0: i32) -> (i32, i32) {
    %c0_i32 = arith.constant 0 : i32
    %c0_i32_0 = arith.constant 0 : i32
    return %c0_i32, %arg0 : i32, i32
  }
  func.func @transform_4(%arg0: i32) -> (i32, i32) {
    %c0_i32 = arith.constant 0 : i32
    %c0_i32_0 = arith.constant 0 : i32
    return %c0_i32, %arg0 : i32, i32
  }
  func.func @transform_5(%arg0: i32) -> (i32, i32) {
    %c0_i32 = arith.constant 0 : i32
    %c0_i32_0 = arith.constant 0 : i32
    return %c0_i32, %arg0 : i32, i32
  }
  func.func @transform_6(%arg0: i32) -> (i32, i32) {
    %c0_i32 = arith.constant 0 : i32
    %c0_i32_0 = arith.constant 0 : i32
    return %c0_i32, %arg0 : i32, i32
  }
  func.func @transform_7(%arg0: i32) -> (i32, i32) {
    %c0_i32 = arith.constant 0 : i32
    %c0_i32_0 = arith.constant 0 : i32
    return %c0_i32, %arg0 : i32, i32
  }
  func.func @transform_8(%arg0: i32) -> (i32, i32) {
    %c0_i32 = arith.constant 0 : i32
    %c0_i32_0 = arith.constant 0 : i32
    return %c0_i32, %arg0 : i32, i32
  }
}

</mosaic_0001>

<llo_original>
// kernel: tpu_custom_call.1
$region0: #{tpu_custom_call.1}
  #allocation0 [shape = 'u32[]', space=smem, size = 0x4, offset = 0x4, fixed_abs, tag = 'smem constant byte address 0x4 - core index']
  #allocation1 [shape = 'u32[144,128]{1,0:T(1,128)}', space=vmem, size = 0x12000, scoped, tag = 'internal scratch']
  %s0 = inlined_call_operand.hbm [shape: f32[8,32], index: 0, kind: input, shape index: {}]
  %s1 = inlined_call_operand.hbm [shape: f32[8,128], index: 1, kind: input, shape index: {}]
  %s2 = inlined_call_operand.hbm [shape: f32[32,512], index: 2, kind: input, shape index: {}]
  %s3 = inlined_call_operand.hbm [shape: f32[128,512], index: 3, kind: input, shape index: {}]
  %s4 = inlined_call_operand.vmem [shape: f32[1,512], index: 4, kind: input, shape index: {}]
  %s5 = inlined_call_operand.vmem [shape: f32[1,512], index: 5, kind: input, shape index: {}]
  %s6 = inlined_call_operand.vmem [shape: f32[8,128], index: 6, kind: input, shape index: {}]
  %s7 = inlined_call_operand.hbm [shape: f32[8,128], index: 7, kind: output, shape index: {0}]
  %s8 = inlined_call_operand.hbm [shape: f32[8,128], index: 8, kind: output, shape index: {1}]
  %9 = xla_tuple %s7, %s8
  %s10 = sld [smem:[#allocation0]]
  $region62: #{tpu_custom_call.1} parent=0
    _
  %s12 = ssub.s32 1, %s10
  %s13 = scalar_select 0, %s12, %s10
  $region1: #{tpu_custom_call.1} parent=0
    #allocation2 [shape = 'u8[4096]{0}', space=vmem, size = 0x1000, scoped, tag = 'input window, operand 0, single buffered']
    #allocation3 [shape = 's32[1]{0}', space=sflag, size = 0x4, scoped, tag = 'scoped memory for tpu_custom_call.1']
    #allocation4 [shape = 's32[1]{0}', space=sflag, size = 0x4, scoped, tag = 'scoped memory for tpu_custom_call.1']
    #allocation5 [shape = 'u8[4096]{0}', space=vmem, size = 0x1000, scoped, tag = 'input window, operand 1, single buffered']
    #allocation6 [shape = 's32[1]{0}', space=sflag, size = 0x4, scoped, tag = 'scoped memory for tpu_custom_call.1']
    #allocation7 [shape = 'u8[65536]{0}', space=vmem, size = 0x10000, scoped, tag = 'input window, operand 2, single buffered']
    #allocation8 [shape = 'u8[262144]{0}', space=vmem, size = 0x40000, scoped, tag = 'input window, operand 3, single buffered']
    #allocation9 [shape = 's32[1]{0}', space=sflag, size = 0x4, scoped, tag = 'scoped memory for tpu_custom_call.1']
    #allocation10 [shape = 'u8[4096]{0}', space=vmem, size = 0x1000, scoped, tag = 'output window, operand 0, single buffered']
    #allocation11 [shape = 'u8[4096]{0}', space=vmem, size = 0x1000, scoped, tag = 'output window, operand 1, single buffered']
    #allocation12 [shape = 's32[1]{0}', space=sflag, size = 0x4, scoped, tag = 'scoped memory for tpu_custom_call.1']
    %14 = vsyncpa [#allocation3], 0
    %15 = vsyncpa [#allocation6], 0
    %16 = vsyncpa [#allocation9], 0
    %17 = vsyncpa [#allocation4], 0
    %18 = vsyncpa [#allocation12], 0
    // Predicated region
    $region2: #{tpu_custom_call.1} parent=1 // pred_check
      _
    $region3: #{tpu_custom_call.1} parent=1 // pred_check_branch
      %20 = sbr.rel (0) target = $region5
    $region4: #{tpu_custom_call.1} parent=1 // pred_region
      %s22 = ssub.s32 128, 128
      %23 = vsyncadd [#allocation3], %s22
      %s25 = sshll.u32 [#allocation2], 4
      %s26 = int_to_ptr.vmem [resolvable:$true] %s25
      %28 = dma.hbm_to_vmem [thread:$0]  %s0, 128, %s26, [#allocation3]
    $region5: #{tpu_custom_call.1} parent=1 // pred_fallthru
      _
    // Predicated region
    $region6: #{tpu_custom_call.1} parent=1 // pred_check
      _
    $region7: #{tpu_custom_call.1} parent=1 // pred_check_branch
      %30 = sbr.rel (0) target = $region9
    $region8: #{tpu_custom_call.1} parent=1 // pred_region
      %s32 = ssub.s32 128, 128
      %33 = vsyncadd [#allocation6], %s32
      %s35 = sshll.u32 [#allocation5], 4
      %s36 = int_to_ptr.vmem [resolvable:$true] %s35
      %38 = dma.hbm_to_vmem [thread:$0]  %s1, 128, %s36, [#allocation6]
    $region9: #{tpu_custom_call.1} parent=1 // pred_fallthru
      _
    // Predicated region
    $region10: #{tpu_custom_call.1} parent=1 // pred_check
      _
    $region11: #{tpu_custom_call.1} parent=1 // pred_check_branch
      %40 = sbr.rel (0) target = $region13
    $region12: #{tpu_custom_call.1} parent=1 // pred_region
      %s42 = ssub.s32 2048, 2048
      %43 = vsyncadd [#allocation6], %s42
      %s44 = sshll.u32 [#allocation7], 4
      %s45 = int_to_ptr.vmem [resolvable:$true] %s44
      %50 = dma.hbm_to_vmem [thread:$0]  %s2, 2048, %s45, [#allocation6], 512, 512, 32
    $region13: #{tpu_custom_call.1} parent=1 // pred_fallthru
      _
    // Predicated region
    $region14: #{tpu_custom_call.1} parent=1 // pred_check
      _
    $region15: #{tpu_custom_call.1} parent=1 // pred_check_branch
      %52 = sbr.rel (0) target = $region17
    $region16: #{tpu_custom_call.1} parent=1 // pred_region
      %s54 = ssub.s32 8192, 8192
      %55 = vsyncadd [#allocation9], %s54
      %s56 = sshll.u32 [#allocation8], 4
      %s57 = int_to_ptr.vmem [resolvable:$true] %s56
      %62 = dma.hbm_to_vmem [thread:$0]  %s3, 8192, %s57, [#allocation9], 512, 512, 32
    $region17: #{tpu_custom_call.1} parent=1 // pred_fallthru
      _
    // Predicated region
    $region18: #{tpu_custom_call.1} parent=1 // pred_check
      _
    $region19: #{tpu_custom_call.1} parent=1 // pred_check_branch
      %64 = sbr.rel (0) target = $region21
    $region20: #{tpu_custom_call.1} parent=1 // pred_region
      _
    $region21: #{tpu_custom_call.1} parent=1 // pred_fallthru
      _
    // Predicated region
    $region22: #{tpu_custom_call.1} parent=1 // pred_check
      _
    $region23: #{tpu_custom_call.1} parent=1 // pred_check_branch
      %66 = sbr.rel (0) target = $region25
    $region24: #{tpu_custom_call.1} parent=1 // pred_region
      _
    $region25: #{tpu_custom_call.1} parent=1 // pred_fallthru
      _
    // Predicated region
    $region26: #{tpu_custom_call.1} parent=1 // pred_check
      _
    $region27: #{tpu_custom_call.1} parent=1 // pred_check_branch
      %68 = sbr.rel (0) target = $region29
    $region28: #{tpu_custom_call.1} parent=1 // pred_region
      _
    $region29: #{tpu_custom_call.1} parent=1 // pred_fallthru
      _
    // Predicated region
    $region30: #{tpu_custom_call.1} parent=1 // pred_check
      _
    $region31: #{tpu_custom_call.1} parent=1 // pred_check_branch
      %70 = sbr.rel (0) target = $region33
    $region32: #{tpu_custom_call.1} parent=1 // pred_region
      %71 = dma.done [#allocation3], 128
    $region33: #{tpu_custom_call.1} parent=1 // pred_fallthru
      _
    // Predicated region
    $region34: #{tpu_custom_call.1} parent=1 // pred_check
      _
    $region35: #{tpu_custom_call.1} parent=1 // pred_check_branch
      %73 = sbr.rel (0) target = $region37
    $region36: #{tpu_custom_call.1} parent=1 // pred_region
      %74 = dma.done [#allocation6], 128
    $region37: #{tpu_custom_call.1} parent=1 // pred_fallthru
      _
    // Predicated region
    $region38: #{tpu_custom_call.1} parent=1 // pred_check
      _
    $region39: #{tpu_custom_call.1} parent=1 // pred_check_branch
      %76 = sbr.rel (0) target = $region41
    $region40: #{tpu_custom_call.1} parent=1 // pred_region
      %77 = dma.done [#allocation6], 2048
    $region41: #{tpu_custom_call.1} parent=1 // pred_fallthru
      _
    // Predicated region
    $region42: #{tpu_custom_call.1} parent=1 // pred_check
      _
    $region43: #{tpu_custom_call.1} parent=1 // pred_check_branch
      %79 = sbr.rel (0) target = $region45
    $region44: #{tpu_custom_call.1} parent=1 // pred_region
      %80 = dma.done [#allocation9], 8192
    $region45: #{tpu_custom_call.1} parent=1 // pred_fallthru
      _
    %v81 = vld [vmem:[#allocation2] sm:$0xff]
    %v82 = vld [vmem:[#allocation5] sm:$0xff]
    %v83 = vld [vmem:[#allocation7] sm:$0xff]
    %v84 = vld [vmem:[#allocation7 + $0x8] sm:$0xff]
    %v85 = vld [vmem:[#allocation7 + $0x10] sm:$0xff]
    %v86 = vld [vmem:[#allocation7 + $0x18] sm:$0xff]
    %v87 = vld [vmem:[#allocation7 + $0x20] sm:$0xff]
    %v88 = vld [vmem:[#allocation7 + $0x28] sm:$0xff]
    %v89 = vld [vmem:[#allocation7 + $0x30] sm:$0xff]
    %v90 = vld [vmem:[#allocation7 + $0x38] sm:$0xff]
    %v91 = vld [vmem:[#allocation7 + $0x40] sm:$0xff]
    %v92 = vld [vmem:[#allocation7 + $0x48] sm:$0xff]
    %v93 = vld [vmem:[#allocation7 + $0x50] sm:$0xff]
    %v94 = vld [vmem:[#allocation7 + $0x58] sm:$0xff]
    %v95 = vld [vmem:[#allocation7 + $0x60] sm:$0xff]
    %v96 = vld [vmem:[#allocation7 + $0x68] sm:$0xff]
    %v97 = vld [vmem:[#allocation7 + $0x70] sm:$0xff]
    %v98 = vld [vmem:[#allocation7 + $0x78] sm:$0xff]
    %v99 = vld [vmem:[#allocation8] sm:$0xff]
    %v100 = vld [vmem:[#allocation8 + $0x8] sm:$0xff]
    %v101 = vld [vmem:[#allocation8 + $0x10] sm:$0xff]
    %v102 = vld [vmem:[#allocation8 + $0x18] sm:$0xff]
    %v103 = vld [vmem:[#allocation8 + $0x20] sm:$0xff]
    %v104 = vld [vmem:[#allocation8 + $0x28] sm:$0xff]
    %v105 = vld [vmem:[#allocation8 + $0x30] sm:$0xff]
    %v106 = vld [vmem:[#allocation8 + $0x38] sm:$0xff]
    %v107 = vld [vmem:[#allocation8 + $0x40] sm:$0xff]
    %v108 = vld [vmem:[#allocation8 + $0x48] sm:$0xff]
    %v109 = vld [vmem:[#allocation8 + $0x50] sm:$0xff]
    %v110 = vld [vmem:[#allocation8 + $0x58] sm:$0xff]
    %v111 = vld [vmem:[#allocation8 + $0x60] sm:$0xff]
    %v112 = vld [vmem:[#allocation8 + $0x68] sm:$0xff]
    %v113 = vld [vmem:[#allocation8 + $0x70] sm:$0xff]
    %v114 = vld [vmem:[#allocation8 + $0x78] sm:$0xff]
    %v115 = vld [vmem:[#allocation8 + $0x80] sm:$0xff]
    %v116 = vld [vmem:[#allocation8 + $0x88] sm:$0xff]
    %v117 = vld [vmem:[#allocation8 + $0x90] sm:$0xff]
    %v118 = vld [vmem:[#allocation8 + $0x98] sm:$0xff]
    %v119 = vld [vmem:[#allocation8 + $0xa0] sm:$0xff]
    %v120 = vld [vmem:[#allocation8 + $0xa8] sm:$0xff]
    %v121 = vld [vmem:[#allocation8 + $0xb0] sm:$0xff]
    %v122 = vld [vmem:[#allocation8 + $0xb8] sm:$0xff]
    %v123 = vld [vmem:[#allocation8 + $0xc0] sm:$0xff]
    %v124 = vld [vmem:[#allocation8 + $0xc8] sm:$0xff]
    %v125 = vld [vmem:[#allocation8 + $0xd0] sm:$0xff]
    %v126 = vld [vmem:[#allocation8 + $0xd8] sm:$0xff]
    %v127 = vld [vmem:[#allocation8 + $0xe0] sm:$0xff]
    %v128 = vld [vmem:[#allocation8 + $0xe8] sm:$0xff]
    %v129 = vld [vmem:[#allocation8 + $0xf0] sm:$0xff]
    %v130 = vld [vmem:[#allocation8 + $0xf8] sm:$0xff]
    %v131 = vld [vmem:[#allocation8 + $0x100] sm:$0xff]
    %v132 = vld [vmem:[#allocation8 + $0x108] sm:$0xff]
    %v133 = vld [vmem:[#allocation8 + $0x110] sm:$0xff]
    %v134 = vld [vmem:[#allocation8 + $0x118] sm:$0xff]
    %v135 = vld [vmem:[#allocation8 + $0x120] sm:$0xff]
    %v136 = vld [vmem:[#allocation8 + $0x128] sm:$0xff]
    %v137 = vld [vmem:[#allocation8 + $0x130] sm:$0xff]
    %v138 = vld [vmem:[#allocation8 + $0x138] sm:$0xff]
    %v139 = vld [vmem:[#allocation8 + $0x140] sm:$0xff]
    %v140 = vld [vmem:[#allocation8 + $0x148] sm:$0xff]
    %v141 = vld [vmem:[#allocation8 + $0x150] sm:$0xff]
    %v142 = vld [vmem:[#allocation8 + $0x158] sm:$0xff]
    %v143 = vld [vmem:[#allocation8 + $0x160] sm:$0xff]
    %v144 = vld [vmem:[#allocation8 + $0x168] sm:$0xff]
    %v145 = vld [vmem:[#allocation8 + $0x170] sm:$0xff]
    %v146 = vld [vmem:[#allocation8 + $0x178] sm:$0xff]
    %v147 = vld [vmem:[#allocation8 + $0x180] sm:$0xff]
    %v148 = vld [vmem:[#allocation8 + $0x188] sm:$0xff]
    %v149 = vld [vmem:[#allocation8 + $0x190] sm:$0xff]
    %v150 = vld [vmem:[#allocation8 + $0x198] sm:$0xff]
    %v151 = vld [vmem:[#allocation8 + $0x1a0] sm:$0xff]
    %v152 = vld [vmem:[#allocation8 + $0x1a8] sm:$0xff]
    %v153 = vld [vmem:[#allocation8 + $0x1b0] sm:$0xff]
    %v154 = vld [vmem:[#allocation8 + $0x1b8] sm:$0xff]
    %v155 = vld [vmem:[#allocation8 + $0x1c0] sm:$0xff]
    %v156 = vld [vmem:[#allocation8 + $0x1c8] sm:$0xff]
    %v157 = vld [vmem:[#allocation8 + $0x1d0] sm:$0xff]
    %v158 = vld [vmem:[#allocation8 + $0x1d8] sm:$0xff]
    %v159 = vld [vmem:[#allocation8 + $0x1e0] sm:$0xff]
    %v160 = vld [vmem:[#allocation8 + $0x1e8] sm:$0xff]
    %v161 = vld [vmem:[#allocation8 + $0x1f0] sm:$0xff]
    %v162 = vld [vmem:[#allocation8 + $0x1f8] sm:$0xff]
    %163 = vmatprep.subr.mxu0 %v100
    %164 = vmatpush1.msra.mxu0 %v99
    %165 = vmatprep.subr.mxu0 %v104
    %166 = vmatpush1.msra.mxu0 %v103
    %167 = vmatprep.subr.mxu0 %v108
    %168 = vmatpush1.msra.mxu0 %v107
    %169 = vmatprep.subr.mxu0 %v112
    %170 = vmatpush1.msra.mxu0 %v111
    %171 = vmatprep.subr.mxu0 %v116
    %172 = vmatpush1.msra.mxu0 %v115
    %173 = vmatprep.subr.mxu0 %v120
    %174 = vmatpush1.msra.mxu0 %v119
    %175 = vmatprep.subr.mxu0 %v124
    %176 = vmatpush1.msra.mxu0 %v123
    %177 = vmatprep.subr.mxu0 %v128
    %178 = vmatpush1.msra.mxu0 %v127
    %179 = vmatprep.subr.mxu0 %v132
    %180 = vmatpush1.msra.mxu0 %v131
    %181 = vmatprep.subr.mxu0 %v136
    %182 = vmatpush1.msra.mxu0 %v135
    %183 = vmatprep.subr.mxu0 %v140
    %184 = vmatpush1.msra.mxu0 %v139
    %185 = vmatprep.subr.mxu0 %v144
    %186 = vmatpush1.msra.mxu0 %v143
    %187 = vmatprep.subr.mxu0 %v148
    %188 = vmatpush1.msra.mxu0 %v147
    %189 = vmatprep.subr.mxu0 %v152
    %190 = vmatpush1.msra.mxu0 %v151
    %191 = vmatprep.subr.mxu0 %v156
    %192 = vmatpush1.msra.mxu0 %v155
    %193 = vmatprep.subr.mxu0 %v160
    %194 = vmatpush1.msra.mxu0 %v159
    %195 = vmatprep.subr.mxu0 0.0
    %196 = vmatpush1.msra.mxu0 0.0
    %197 = vmatprep.subr.mxu0 0.0
    %198 = vmatpush1.msra.mxu0 0.0
    %199 = vmatprep.subr.mxu0 0.0
    %200 = vmatpush1.msra.mxu0 0.0
    %201 = vmatprep.subr.mxu0 0.0
    %202 = vmatpush1.msra.mxu0 0.0
    %203 = vmatprep.subr.mxu0 0.0
    %204 = vmatpush1.msra.mxu0 0.0
    %205 = vmatprep.subr.mxu0 0.0
    %206 = vmatpush1.msra.mxu0 0.0
    %207 = vmatprep.subr.mxu0 0.0
    %208 = vmatpush1.msra.mxu0 0.0
    %209 = vmatprep.subr.mxu0 0.0
    %210 = vmatpush1.msra.mxu0 0.0
    %211 = vmatprep.subr.mxu0 0.0
    %212 = vmatpush1.msra.mxu0 0.0
    %213 = vmatprep.subr.mxu0 0.0
    %214 = vmatpush1.msra.mxu0 0.0
    %215 = vmatprep.subr.mxu0 0.0
    %216 = vmatpush1.msra.mxu0 0.0
    %217 = vmatprep.subr.mxu0 0.0
    %218 = vmatpush1.msra.mxu0 0.0
    %219 = vmatprep.subr.mxu0 0.0
    %220 = vmatpush1.msra.mxu0 0.0
    %221 = vmatprep.subr.mxu0 0.0
    %222 = vmatpush1.msra.mxu0 0.0
    %223 = vmatprep.subr.mxu0 0.0
    %224 = vmatpush1.msra.mxu0 0.0
    %225 = vmatprep.subr.mxu0 0.0
    %226 = vmatpush1.msra.mxu0 0.0
    %227 = vmatprep.mubr.f32.mxu0 0.0
    %228 = vmatmul.mubr.f32.gmra.mrb[0].mxu0 %v82
    %v229 = vpop.f32.mrb[0].mxu0
    %v230 = vadd.f32 0.0, %v229
    %v231 = vpop.f32.mrb[0].mxu0
    %v232 = vadd.f32 0.0, %v231
    %233 = vdwg.mxu0
    %234 = vmatprep.subr.mxu0 %v102
    %235 = vmatpush1.msra.mxu0 %v101
    %236 = vmatprep.subr.mxu0 %v106
    %237 = vmatpush1.msra.mxu0 %v105
    %238 = vmatprep.subr.mxu0 %v110
    %239 = vmatpush1.msra.mxu0 %v109
    %240 = vmatprep.subr.mxu0 %v114
    %241 = vmatpush1.msra.mxu0 %v113
    %242 = vmatprep.subr.mxu0 %v118
    %243 = vmatpush1.msra.mxu0 %v117
    %244 = vmatprep.subr.mxu0 %v122
    %245 = vmatpush1.msra.mxu0 %v121
    %246 = vmatprep.subr.mxu0 %v126
    %247 = vmatpush1.msra.mxu0 %v125
    %248 = vmatprep.subr.mxu0 %v130
    %249 = vmatpush1.msra.mxu0 %v129
    %250 = vmatprep.subr.mxu0 %v134
    %251 = vmatpush1.msra.mxu0 %v133
    %252 = vmatprep.subr.mxu0 %v138
    %253 = vmatpush1.msra.mxu0 %v137
    %254 = vmatprep.subr.mxu0 %v142
    %255 = vmatpush1.msra.mxu0 %v141
    %256 = vmatprep.subr.mxu0 %v146
    %257 = vmatpush1.msra.mxu0 %v145
    %258 = vmatprep.subr.mxu0 %v150
    %259 = vmatpush1.msra.mxu0 %v149
    %260 = vmatprep.subr.mxu0 %v154
    %261 = vmatpush1.msra.mxu0 %v153
    %262 = vmatprep.subr.mxu0 %v158
    %263 = vmatpush1.msra.mxu0 %v157
    %264 = vmatprep.subr.mxu0 %v162
    %265 = vmatpush1.msra.mxu0 %v161
    %266 = vmatprep.subr.mxu0 0.0
    %267 = vmatpush1.msra.mxu0 0.0
    %268 = vmatprep.subr.mxu0 0.0
    %269 = vmatpush1.msra.mxu0 0.0
    %270 = vmatprep.subr.mxu0 0.0
    %271 = vmatpush1.msra.mxu0 0.0
    %272 = vmatprep.subr.mxu0 0.0
    %273 = vmatpush1.msra.mxu0 0.0
    %274 = vmatprep.subr.mxu0 0.0
    %275 = vmatpush1.msra.mxu0 0.0
    %276 = vmatprep.subr.mxu0 0.0
    %277 = vmatpush1.msra.mxu0 0.0
    %278 = vmatprep.subr.mxu0 0.0
    %279 = vmatpush1.msra.mxu0 0.0
    %280 = vmatprep.subr.mxu0 0.0
    %281 = vmatpush1.msra.mxu0 0.0
    %282 = vmatprep.subr.mxu0 0.0
    %283 = vmatpush1.msra.mxu0 0.0
    %284 = vmatprep.subr.mxu0 0.0
    %285 = vmatpush1.msra.mxu0 0.0
    %286 = vmatprep.subr.mxu0 0.0
    %287 = vmatpush1.msra.mxu0 0.0
    %288 = vmatprep.subr.mxu0 0.0
    %289 = vmatpush1.msra.mxu0 0.0
    %290 = vmatprep.subr.mxu0 0.0
    %291 = vmatpush1.msra.mxu0 0.0
    %292 = vmatprep.subr.mxu0 0.0
    %293 = vmatpush1.msra.mxu0 0.0
    %294 = vmatprep.subr.mxu0 0.0
    %295 = vmatpush1.msra.mxu0 0.0
    %296 = vmatprep.subr.mxu0 0.0
    %297 = vmatpush1.msra.mxu0 0.0
    %298 = vmatprep.mubr.f32.mxu0 0.0
    %299 = vmatmul.mubr.f32.gmra.mrb[0].mxu0 %v82
    %v300 = vpop.f32.mrb[0].mxu0
    %v301 = vadd.f32 0.0, %v300
    %v302 = vpop.f32.mrb[0].mxu0
    %v303 = vadd.f32 0.0, %v302
    %304 = vdwg.mxu0
    %vm305 = vcmask 261120
    %v307 = vsel %vm305, %v81, 0
    %309 = vmatprep.subr.mxu0 %v84
    %310 = vmatpush1.msra.mxu0 %v83
    %311 = vmatprep.subr.mxu0 %v88
    %312 = vmatpush1.msra.mxu0 %v87
    %313 = vmatprep.subr.mxu0 %v92
    %314 = vmatpush1.msra.mxu0 %v91
    %315 = vmatprep.subr.mxu0 %v96
    %316 = vmatpush1.msra.mxu0 %v95
    %317 = vmatprep.subr.mxu0 0.0
    %318 = vmatpush1.msra.mxu0 0.0
    %319 = vmatprep.subr.mxu0 0.0
    %320 = vmatpush1.msra.mxu0 0.0
    %321 = vmatprep.subr.mxu0 0.0
    %322 = vmatpush1.msra.mxu0 0.0
    %323 = vmatprep.subr.mxu0 0.0
    %324 = vmatpush1.msra.mxu0 0.0
    %325 = vmatprep.subr.mxu0 0.0
    %326 = vmatpush1.msra.mxu0 0.0
    %327 = vmatprep.subr.mxu0 0.0
    %328 = vmatpush1.msra.mxu0 0.0
    %329 = vmatprep.subr.mxu0 0.0
    %330 = vmatpush1.msra.mxu0 0.0
    %331 = vmatprep.subr.mxu0 0.0
    %332 = vmatpush1.msra.mxu0 0.0
    %333 = vmatprep.subr.mxu0 0.0
    %334 = vmatpush1.msra.mxu0 0.0
    %335 = vmatprep.subr.mxu0 0.0
    %336 = vmatpush1.msra.mxu0 0.0
    %337 = vmatprep.subr.mxu0 0.0
    %338 = vmatpush1.msra.mxu0 0.0
    %339 = vmatprep.subr.mxu0 0.0
    %340 = vmatpush1.msra.mxu0 0.0
    %341 = vmatprep.subr.mxu0 0.0
    %342 = vmatpush1.msra.mxu0 0.0
    %343 = vmatprep.subr.mxu0 0.0
    %344 = vmatpush1.msra.mxu0 0.0
    %345 = vmatprep.subr.mxu0 0.0
    %346 = vmatpush1.msra.mxu0 0.0
    %347 = vmatprep.subr.mxu0 0.0
    %348 = vmatpush1.msra.mxu0 0.0
    %349 = vmatprep.subr.mxu0 0.0
    %350 = vmatpush1.msra.mxu0 0.0
    %351 = vmatprep.subr.mxu0 0.0
    %352 = vmatpush1.msra.mxu0 0.0
    %353 = vmatprep.subr.mxu0 0.0
    %354 = vmatpush1.msra.mxu0 0.0
    %355 = vmatprep.subr.mxu0 0.0
    %356 = vmatpush1.msra.mxu0 0.0
    %357 = vmatprep.subr.mxu0 0.0
    %358 = vmatpush1.msra.mxu0 0.0
    %359 = vmatprep.subr.mxu0 0.0
    %360 = vmatpush1.msra.mxu0 0.0
    %361 = vmatprep.subr.mxu0 0.0
    %362 = vmatpush1.msra.mxu0 0.0
    %363 = vmatprep.subr.mxu0 0.0
    %364 = vmatpush1.msra.mxu0 0.0
    %365 = vmatprep.subr.mxu0 0.0
    %366 = vmatpush1.msra.mxu0 0.0
    %367 = vmatprep.subr.mxu0 0.0
    %368 = vmatpush1.msra.mxu0 0.0
    %369 = vmatprep.subr.mxu0 0.0
    %370 = vmatpush1.msra.mxu0 0.0
    %371 = vmatprep.subr.mxu0 0.0
    %372 = vmatpush1.msra.mxu0 0.0
    %373 = vmatprep.mubr.f32.mxu0 0.0
    %374 = vmatmul.mubr.f32.gmra.mrb[0].mxu0 %v307
    %v375 = vpop.f32.mrb[0].mxu0
    %v376 = vadd.f32 %v230, %v375
    %v377 = vpop.f32.mrb[0].mxu0
    %v378 = vadd.f32 %v232, %v377
    %379 = vdwg.mxu0
    %380 = vmatprep.subr.mxu0 %v86
    %381 = vmatpush1.msra.mxu0 %v85
    %382 = vmatprep.subr.mxu0 %v90
    %383 = vmatpush1.msra.mxu0 %v89
    %384 = vmatprep.subr.mxu0 %v94
    %385 = vmatpush1.msra.mxu0 %v93
    %386 = vmatprep.subr.mxu0 %v98
    %387 = vmatpush1.msra.mxu0 %v97
    %388 = vmatprep.subr.mxu0 0.0
    %389 = vmatpush1.msra.mxu0 0.0
    %390 = vmatprep.subr.mxu0 0.0
    %391 = vmatpush1.msra.mxu0 0.0
    %392 = vmatprep.subr.mxu0 0.0
    %393 = vmatpush1.msra.mxu0 0.0
    %394 = vmatprep.subr.mxu0 0.0
    %395 = vmatpush1.msra.mxu0 0.0
    %396 = vmatprep.subr.mxu0 0.0
    %397 = vmatpush1.msra.mxu0 0.0
    %398 = vmatprep.subr.mxu0 0.0
    %399 = vmatpush1.msra.mxu0 0.0
    %400 = vmatprep.subr.mxu0 0.0
    %401 = vmatpush1.msra.mxu0 0.0
    %402 = vmatprep.subr.mxu0 0.0
    %403 = vmatpush1.msra.mxu0 0.0
    %404 = vmatprep.subr.mxu0 0.0
    %405 = vmatpush1.msra.mxu0 0.0
    %406 = vmatprep.subr.mxu0 0.0
    %407 = vmatpush1.msra.mxu0 0.0
    %408 = vmatprep.subr.mxu0 0.0
    %409 = vmatpush1.msra.mxu0 0.0
    %410 = vmatprep.subr.mxu0 0.0
    %411 = vmatpush1.msra.mxu0 0.0
    %412 = vmatprep.subr.mxu0 0.0
    %413 = vmatpush1.msra.mxu0 0.0
    %414 = vmatprep.subr.mxu0 0.0
    %415 = vmatpush1.msra.mxu0 0.0
    %416 = vmatprep.subr.mxu0 0.0
    %417 = vmatpush1.msra.mxu0 0.0
    %418 = vmatprep.subr.mxu0 0.0
    %419 = vmatpush1.msra.mxu0 0.0
    %420 = vmatprep.subr.mxu0 0.0
    %421 = vmatpush1.msra.mxu0 0.0
    %422 = vmatprep.subr.mxu0 0.0
    %423 = vmatpush1.msra.mxu0 0.0
    %424 = vmatprep.subr.mxu0 0.0
    %425 = vmatpush1.msra.mxu0 0.0
    %426 = vmatprep.subr.mxu0 0.0
    %427 = vmatpush1.msra.mxu0 0.0
    %428 = vmatprep.subr.mxu0 0.0
    %429 = vmatpush1.msra.mxu0 0.0
    %430 = vmatprep.subr.mxu0 0.0
    %431 = vmatpush1.msra.mxu0 0.0
    %432 = vmatprep.subr.mxu0 0.0
    %433 = vmatpush1.msra.mxu0 0.0
    %434 = vmatprep.subr.mxu0 0.0
    %435 = vmatpush1.msra.mxu0 0.0
    %436 = vmatprep.subr.mxu0 0.0
    %437 = vmatpush1.msra.mxu0 0.0
    %438 = vmatprep.subr.mxu0 0.0
    %439 = vmatpush1.msra.mxu0 0.0
    %440 = vmatprep.subr.mxu0 0.0
    %441 = vmatpush1.msra.mxu0 0.0
    %442 = vmatprep.subr.mxu0 0.0
    %443 = vmatpush1.msra.mxu0 0.0
    %444 = vmatprep.mubr.f32.mxu0 0.0
    %445 = vmatmul.mubr.f32.gmra.mrb[0].mxu0 %v307
    %v446 = vpop.f32.mrb[0].mxu0
    %v447 = vadd.f32 %v301, %v446
    %v448 = vpop.f32.mrb[0].mxu0
    %v449 = vadd.f32 %v303, %v448
    %450 = vdwg.mxu0
    %v451 = vld [vmem:[%s5] sm:$0xf]
    %v453 = vlaneseq
    %v454 = vshrl.u32 %v453, 7
    %v455 = vsub.s32 0, %v454
    %v456 = vrot.slane %v451, %v455
    %v457 = vlaneseq
    %v458 = vshrl.u32 %v457, 7
    %v459 = vsub.s32 1, %v458
    %v460 = vrot.slane %v451, %v459
    %v461 = vlaneseq
    %v462 = vshrl.u32 %v461, 7
    %v463 = vsub.s32 2, %v462
    %v464 = vrot.slane %v451, %v463
    %v465 = vlaneseq
    %v466 = vshrl.u32 %v465, 7
    %v467 = vsub.s32 3, %v466
    %v468 = vrot.slane %v451, %v467
    %v473 = vadd.f32 %v376, %v456
    %v474 = vadd.f32 %v378, %v460
    %v475 = vadd.f32 %v447, %v464
    %v476 = vadd.f32 %v449, %v468
    %v477 = vxor.u32 %v473, 2147483648
    %v478 = vmul.f32 %v477, 1.442695
    %v479 = vpow.pop %v478
    %v480 = vadd.f32 %v479, 1.0
    %v481 = vrcp.pop %v480
    %v482 = vmul.f32 1.0, %v481
    %v483 = vxor.u32 %v474, 2147483648
    %v484 = vmul.f32 %v483, 1.442695
    %v485 = vpow.pop %v484
    %v486 = vadd.f32 %v485, 1.0
    %v487 = vrcp.pop %v486
    %v488 = vmul.f32 1.0, %v487
    %v489 = vtanh.pop %v475
    %v490 = vxor.u32 %v476, 2147483648
    %v491 = vmul.f32 %v490, 1.442695
    %v492 = vpow.pop %v491
    %v493 = vadd.f32 %v492, 1.0
    %v494 = vrcp.pop %v493
    %v495 = vmul.f32 1.0, %v494
    %v496 = vld [vmem:[%s6] sm:$0xff]
    %v497 = vmul.f32 %v488, %v496
    %v498 = vmul.f32 %v482, %v489
    %v499 = vadd.f32 %v497, %v498
    %v500 = vtanh.pop %v499
    %v501 = vmul.f32 %v495, %v500
    %502 = vst [vmem:[#allocation11] sm:$0xff] %v499
    %503 = vst [vmem:[#allocation10] sm:$0xff] %v501
    // Predicated region
    $region46: #{tpu_custom_call.1} parent=1 // pred_check
      _
    $region47: #{tpu_custom_call.1} parent=1 // pred_check_branch
      %505 = sbr.rel (0) target = $region49
    $region48: #{tpu_custom_call.1} parent=1 // pred_region
      %s507 = ssub.s32 128, 128
      %508 = vsyncadd [#allocation4], %s507
      %s510 = sshll.u32 [#allocation10], 4
      %s511 = int_to_ptr.vmem [resolvable:$true] %s510
      %513 = dma.vmem_to_hbm [thread:$0]  %s511, 128, %s7, [#allocation4]
    $region49: #{tpu_custom_call.1} parent=1 // pred_fallthru
      _
    // Predicated region
    $region50: #{tpu_custom_call.1} parent=1 // pred_check
      _
    $region51: #{tpu_custom_call.1} parent=1 // pred_check_branch
      %515 = sbr.rel (0) target = $region53
    $region52: #{tpu_custom_call.1} parent=1 // pred_region
      %s517 = ssub.s32 128, 128
      %518 = vsyncadd [#allocation12], %s517
      %s520 = sshll.u32 [#allocation11], 4
      %s521 = int_to_ptr.vmem [resolvable:$true] %s520
      %523 = dma.vmem_to_hbm [thread:$0]  %s521, 128, %s8, [#allocation12]
    $region53: #{tpu_custom_call.1} parent=1 // pred_fallthru
      _
    // Predicated region
    $region54: #{tpu_custom_call.1} parent=1 // pred_check
      _
    $region55: #{tpu_custom_call.1} parent=1 // pred_check_branch
      %525 = sbr.rel (0) target = $region57
    $region56: #{tpu_custom_call.1} parent=1 // pred_region
      %526 = dma.done [#allocation4], 128
    $region57: #{tpu_custom_call.1} parent=1 // pred_fallthru
      _
    // Predicated region
    $region58: #{tpu_custom_call.1} parent=1 // pred_check
      _
    $region59: #{tpu_custom_call.1} parent=1 // pred_check_branch
      %528 = sbr.rel (0) target = $region61
    $region60: #{tpu_custom_call.1} parent=1 // pred_region
      %529 = dma.done [#allocation12], 128
    $region61: #{tpu_custom_call.1} parent=1 // pred_fallthru
      _
    %530 = vsyncpa [#allocation3], 1
    %531 = vsyncpa [#allocation6], 1
    %532 = vsyncpa [#allocation9], 1
    %533 = vsyncpa [#allocation4], 1
    %534 = vsyncpa [#allocation12], 1

</llo_original>
